<compile_context>
chip_gen: v7x
topology: tpu7x:2x2x1
jax: 0.10.0
libtpu: 0.0.40
codegen_flags: <defaults>
</compile_context>

<pallas_src>
import math

import jax
import jax.numpy as jnp
from jax.experimental import pallas as pl
from jax.experimental.pallas import tpu as pltpu


def _round_up(n: int, m: int) -> int:
    return ((n + m - 1) // m) * m


def _pad2d(a, rows: int, cols: int):
    r, c = a.shape
    if r == rows and c == cols:
        return a
    return jnp.pad(a, ((0, rows - r), (0, cols - c)))


def _vmem_capacity_bytes() -> int:
    try:
        return int(pltpu.get_tpu_info().vmem_capacity_bytes)
    except Exception:
        return 64 * 1024 * 1024  # conservative fallback (v7x per-TC VMEM)


def _pick_tk(f_pad: int, target: int) -> int:
    """Largest multiple of 128 dividing f_pad and <= max(target, 128)."""
    n = f_pad // 128
    best = 128
    for d in range(1, n + 1):
        if n % d == 0 and d * 128 <= max(target, 128):
            best = d * 128
    return best


def _gelu(h, approximate: bool):
    if approximate:
        # tanh form routes through the EUP slot (VALU relief); slight numeric deviation.
        return jax.nn.gelu(h, approximate=True)
    # exact erf form == torch.nn.functional.gelu default
    return 0.5 * h * (1.0 + jax.lax.erf(h * 0.7071067811865476))


def _layernorm(h, gamma, beta, eps: float, h_true: int, h_pad: int):
    # Padded lanes of h are exactly zero (zero-padded w1/b1, GELU(0)=0), so the mean
    # sum is unaffected; they only need masking out of the variance term.
    inv_h = 1.0 / float(h_true)
    mean = jnp.sum(h, axis=-1, keepdims=True) * inv_h
    diff = h - mean
    if h_pad != h_true:
        col = jax.lax.broadcasted_iota(jnp.int32, (1, h_pad), 1)
        diff = jnp.where(col < h_true, diff, 0.0)
    var = jnp.sum(diff * diff, axis=-1, keepdims=True) * inv_h
    # gamma/beta padded lanes are 0, so padded output lanes stay exactly 0.
    return diff * jax.lax.rsqrt(var + eps) * gamma + beta


def _make_fused_kernel(eps: float, h_true: int, h_pad: int, approx_gelu: bool):
    def kernel(x_ref, w1_ref, w2_ref, aff_ref, o_ref):
        # Linear 1: bf16 operands, f32 accumulation on the MXU.
        x = x_ref[...].astype(jnp.bfloat16)
        h = jnp.dot(x, w1_ref[...], preferred_element_type=jnp.float32)
        h = h + aff_ref[0:1, :]                      # b1
        h = _gelu(h, approx_gelu)
        hn = _layernorm(h, aff_ref[2:3, :], aff_ref[3:4, :], eps, h_true, h_pad)
        # Dropout: identity in inference/eval mode.
        # TODO(synk): training-mode dropout (pltpu.prng_* Bernoulli mask) omitted.
        out = jnp.dot(hn.astype(jnp.bfloat16), w2_ref[...],
                      preferred_element_type=jnp.float32)
        o_ref[...] = (out + aff_ref[1:2, :]).astype(o_ref.dtype)

    return kernel


def _make_ktiled_kernel(eps: float, h_true: int, h_pad: int, approx_gelu: bool):
    def kernel(x_ref, w1_ref, w2_ref, aff_ref, o_ref, acc_ref):
        k = pl.program_id(1)

        @pl.when(k == 0)
        def _():
            acc_ref[...] = jnp.zeros_like(acc_ref)

        x = x_ref[...].astype(jnp.bfloat16)
        acc_ref[...] += jnp.dot(x, w1_ref[...], preferred_element_type=jnp.float32)

        @pl.when(k == pl.num_programs(1) - 1)
        def _():
            h = acc_ref[...] + aff_ref[0:1, :]       # b1
            h = _gelu(h, approx_gelu)
            hn = _layernorm(h, aff_ref[2:3, :], aff_ref[3:4, :], eps, h_true, h_pad)
            # Dropout: identity in inference/eval mode.
            out = jnp.dot(hn.astype(jnp.bfloat16), w2_ref[...],
                          preferred_element_type=jnp.float32)
            o_ref[...] = (out + aff_ref[1:2, :]).astype(o_ref.dtype)

    return kernel


def graphmlp_block(x, w1, b1, w2, b2, gamma, beta, *, eps: float = 1e-6,
                   dropout_prob: float = 0.0, tm: int = 512, tk=None,
                   out_dtype=jnp.float32, approximate_gelu: bool = False):
    """x: (rows, F) float32.  Returns (rows, H) in `out_dtype`.

    dropout_prob is accepted for interface parity; eval mode => identity.
    """
    del dropout_prob  # TODO(synk): training-mode dropout not implemented (eval only).
    M, F = x.shape
    H = w1.shape[1]

    # Lane-dense padding (last dims -> multiple of 128); rows -> multiple of 16
    # (bf16 native sublane tile is (16, 128)).
    F_pad = _round_up(F, 128)
    H_pad = _round_up(H, 128)
    M16 = _round_up(M, 16)

    out_bytes = jnp.finfo(out_dtype).bits // 8
    vmem_cap = _vmem_capacity_bytes()
    budget = max(vmem_cap - (8 << 20), 16 << 20)

    # K-tiling if a resident w1 would eat too much VMEM (or if explicitly forced).
    w1_bytes = F_pad * H_pad * 2
    use_ktile = (tk is not None) or (w1_bytes > budget // 3)

    if use_ktile:
        target_tk = tk if tk is not None else max(128, (2 << 20) // (H_pad * 2))
        TK = _pick_tk(F_pad, target_tk)
        # w2 + packed affine single-buffered; w1 streamed double-buffered.
        const_bytes = H_pad * H_pad * 2 + 8 * H_pad * 4 + 2 * TK * H_pad * 2
        per_row = (2 * TK * 4            # x tile (double-buffered, worst case f32)
                   + 2 * H_pad * out_bytes   # out tile (double-buffered)
                   + H_pad * 4               # f32 accumulator scratch
                   + 5 * H_pad * 4)          # in-kernel f32 temporaries headroom
    else:
        TK = F_pad
        const_bytes = w1_bytes + H_pad * H_pad * 2 + 8 * H_pad * 4  # single-buffered
        per_row = 2 * F_pad * 4 + 2 * H_pad * out_bytes + 5 * H_pad * 4

    tm_cap = max(16, ((budget - const_bytes) // max(per_row, 1)) // 16 * 16)
    TM_req = max(16, min(_round_up(tm, 16), M16, tm_cap))
    grid_m = pl.cdiv(M16, TM_req)
    if M16 >= 1024:
        grid_m = max(grid_m, 2)  # keep both TCs busy on megacore parts (v7x)
    TM = _round_up(pl.cdiv(M16, grid_m), 16)
    M_pad = TM * grid_m
    grid_k = F_pad // TK

    # x: pad (and fold the bf16 cast into the same pass) only when needed; otherwise
    # pass through untouched and cast the VMEM tile inside the kernel.
    if (M_pad != M) or (F_pad != F):
        x_in = _pad2d(x, M_pad, F_pad).astype(jnp.bfloat16)
    else:
        x_in = x
    x_itemsize = x_in.dtype.itemsize

    # Weights bf16 (halves weight DMA bytes, MXU-native); bias/affine packed into one
    # (8, H_pad) f32 operand: rows 0..3 = b1, b2, gamma, beta.
    w1_p = _pad2d(w1, F_pad, H_pad).astype(jnp.bfloat16)
    w2_p = _pad2d(w2, H_pad, H_pad).astype(jnp.bfloat16)
    aff = jnp.zeros((8, H_pad), jnp.float32)
    aff = aff.at[0, :H].set(b1.reshape(-1))
    aff = aff.at[1, :H].set(b2.reshape(-1))
    aff = aff.at[2, :H].set(gamma.reshape(-1))
    aff = aff.at[3, :H].set(beta.reshape(-1))

    # Advisory cost estimate for XLA's scheduler.
    flops = 2 * M_pad * (F_pad * H_pad + H_pad * H_pad)
    bytes_accessed = (M_pad * F_pad * x_itemsize
                      + (F_pad * H_pad + H_pad * H_pad) * 2
                      + 8 * H_pad * 4
                      + M_pad * H_pad * out_bytes)
    cost = pl.CostEstimate(flops=flops, transcendentals=M_pad * H_pad,
                           bytes_accessed=bytes_accessed)

    est = (const_bytes
           + 2 * TM * TK * x_itemsize
           + 2 * TM * H_pad * out_bytes
           + (TM * H_pad * 4 if use_ktile else 0)
           + 6 * TM * H_pad * 4)
    vmem_limit = int(min(vmem_cap, max(est + (4 << 20), 16 << 20)))

    if use_ktile:
        kernel = _make_ktiled_kernel(eps, H, H_pad, approximate_gelu)
        grid = (grid_m, grid_k)
        in_specs = [
            pl.BlockSpec((TM, TK), lambda i, k: (i, k)),                    # x
            pl.BlockSpec((TK, H_pad), lambda i, k: (k, 0)),                 # w1 streamed
            pl.BlockSpec((H_pad, H_pad), lambda i, k: (0, 0),
                         pipeline_mode=pl.Buffered(1)),                     # w2 resident
            pl.BlockSpec((8, H_pad), lambda i, k: (0, 0),
                         pipeline_mode=pl.Buffered(1)),                     # bias/affine
        ]
        out_spec = pl.BlockSpec((TM, H_pad), lambda i, k: (i, 0))
        scratch = [pltpu.VMEM((TM, H_pad), jnp.float32)]
        semantics = ("parallel", "arbitrary")
    else:
        kernel = _make_fused_kernel(eps, H, H_pad, approximate_gelu)
        grid = (grid_m,)
        in_specs = [
            pl.BlockSpec((TM, F_pad), lambda i: (i, 0)),                    # x tiled
            pl.BlockSpec((F_pad, H_pad), lambda i: (0, 0),
                         pipeline_mode=pl.Buffered(1)),                     # w1 resident
            pl.BlockSpec((H_pad, H_pad), lambda i: (0, 0),
                         pipeline_mode=pl.Buffered(1)),                     # w2 resident
            pl.BlockSpec((8, H_pad), lambda i: (0, 0),
                         pipeline_mode=pl.Buffered(1)),                     # bias/affine
        ]
        out_spec = pl.BlockSpec((TM, H_pad), lambda i: (i, 0))
        scratch = []
        semantics = ("parallel",)

    out = pl.pallas_call(
        kernel,
        out_shape=jax.ShapeDtypeStruct((M_pad, H_pad), out_dtype),
        grid=grid,
        in_specs=in_specs,
        out_specs=out_spec,
        scratch_shapes=scratch,
        compiler_params=pltpu.CompilerParams(
            dimension_semantics=semantics,
            vmem_limit_bytes=vmem_limit,
        ),
        cost_estimate=cost,
    )(x_in, w1_p, w2_p, aff)

    if M_pad != M or H_pad != H:
        out = out[:M, :H]
    return out


def init_params(key, num_features, hidden_dim, eps=1e-6):
    """Deterministic parameter init mirroring GraphMLPBlock._init_weights."""
    k1, k2, k3, k4 = jax.random.split(key, 4)

    # xavier_uniform_: U(-a, a), a = sqrt(6 / (fan_in + fan_out))
    a1 = math.sqrt(6.0 / (num_features + hidden_dim))
    w1 = jax.random.uniform(k1, (num_features, hidden_dim), jnp.float32, -a1, a1)
    a2 = math.sqrt(6.0 / (hidden_dim + hidden_dim))
    w2 = jax.random.uniform(k2, (hidden_dim, hidden_dim), jnp.float32, -a2, a2)

    # biases: normal(std=eps)
    b1 = eps * jax.random.normal(k3, (1, hidden_dim), jnp.float32)
    b2 = eps * jax.random.normal(k4, (1, hidden_dim), jnp.float32)

    # LayerNorm affine params
    gamma = jnp.ones((1, hidden_dim), jnp.float32)
    beta = jnp.zeros((1, hidden_dim), jnp.float32)
    return w1, b1, w2, b2, gamma, beta


def reference(x, w1, b1, w2, b2, gamma, beta, eps=1e-6, bf16_matmuls=True):
    """Pure-JAX reference (optionally mimicking the kernel's bf16 matmuls)."""
    cast = (lambda a: a.astype(jnp.bfloat16)) if bf16_matmuls else (lambda a: a)
    h = jnp.dot(cast(x), cast(w1), preferred_element_type=jnp.float32) + b1
    h = 0.5 * h * (1.0 + jax.lax.erf(h * 0.7071067811865476))
    mean = jnp.mean(h, axis=-1, keepdims=True)
    var = jnp.mean((h - mean) ** 2, axis=-1, keepdims=True)
    hn = (h - mean) * jax.lax.rsqrt(var + eps) * gamma + beta
    return jnp.dot(cast(hn), cast(w2), preferred_element_type=jnp.float32) + b2


if __name__ == "__main__":
    eps = 1e-6
    key = jax.random.PRNGKey(0)
    kx, kp, kx2, kp2, kx3 = jax.random.split(key, 5)

    # 1) Small demo shapes implied by the module: (batch, seq, num_features).
    batch, seq = 2, 8
    num_features, hidden_dim = 16, 32
    params = init_params(kp, num_features, hidden_dim, eps)

    x3d = jax.random.normal(kx, (batch, seq, num_features), jnp.float32)
    x2d = x3d.reshape(batch * seq, num_features)
    out2d = graphmlp_block(x2d, *params, eps=eps)
    out = out2d.reshape(batch, seq, hidden_dim)
    jax.block_until_ready(out)
    ref = reference(x2d, *params, eps=eps).reshape(batch, seq, hidden_dim)
    assert jnp.allclose(out, ref, atol=2e-3, rtol=2e-3), "mismatch vs reference"

    # 2) Row tiling (grid_m > 1) + row padding.
    rows2 = 320
    x2 = jax.random.normal(kx2, (rows2, num_features), jnp.float32)
    out2 = graphmlp_block(x2, *params, eps=eps, tm=128)
    jax.block_until_ready(out2)
    ref2 = reference(x2, *params, eps=eps)
    assert jnp.allclose(out2, ref2, atol=2e-3, rtol=2e-3), "tiled mismatch vs reference"

    # 3) Forced K-tiling path (accumulator scratch) + bf16 output writeback.
    f3, h3, rows3 = 256, 128, 64
    params3 = init_params(kp2, f3, h3, eps)
    x3 = jax.random.normal(kx3, (rows3, f3), jnp.float32)
    out3 = graphmlp_block(x3, *params3, eps=eps, tk=128, out_dtype=jnp.bfloat16)
    jax.block_until_ready(out3)
    ref3 = reference(x3, *params3, eps=eps)
    assert jnp.allclose(out3.astype(jnp.float32), ref3, atol=5e-2, rtol=5e-2), \
        "k-tiled mismatch vs reference"

    print("KERNEL_OK")
</pallas_src>

<mosaic_0001>
module attributes {stable_mosaic.version = 11 : i64} {
  func.func @kernel(%arg0: i32, %arg1: memref<16x128xbf16, #tpu.memory_space<vmem>>, %arg2: memref<128x128xbf16, #tpu.memory_space<vmem>>, %arg3: memref<128x128xbf16, #tpu.memory_space<vmem>>, %arg4: memref<8x128xf32, #tpu.memory_space<vmem>>, %arg5: memref<16x128xf32, #tpu.memory_space<vmem>>) attributes {dimension_semantics = [#tpu.dimension_semantics<parallel>], iteration_bounds = array<i64: 1>, scalar_prefetch = 0 : i64, scratch_operands = 0 : i64, tpu.core_type = #tpu.core_type<tc>, window_params = [{transform_indices = @transform_0, window_bounds = array<i64: 16, 128>}, {pipeline_mode = #tpu.pipeline_mode<synchronous>, transform_indices = @transform_1, window_bounds = array<i64: 128, 128>}, {pipeline_mode = #tpu.pipeline_mode<synchronous>, transform_indices = @transform_2, window_bounds = array<i64: 128, 128>}, {pipeline_mode = #tpu.pipeline_mode<synchronous>, transform_indices = @transform_3, window_bounds = array<i64: 8, 128>}, {transform_indices = @transform_4, window_bounds = array<i64: 16, 128>}]} {
    %c0 = arith.constant 0 : index
    %c0_0 = arith.constant 0 : index
    %0 = vector.load %arg1[%c0, %c0_0] : memref<16x128xbf16, #tpu.memory_space<vmem>>, vector<16x128xbf16>
    %c0_1 = arith.constant 0 : index
    %c0_2 = arith.constant 0 : index
    %1 = vector.load %arg2[%c0_1, %c0_2] : memref<128x128xbf16, #tpu.memory_space<vmem>>, vector<128x128xbf16>
    %cst = arith.constant dense<0.000000e+00> : vector<16x128xf32>
    %2 = tpu.matmul %0, %1, %cst {dimension_numbers = #tpu.dot_dimension_numbers<[1], [0], [0], [1], [0, 0, 1, 1], [], []>} : vector<16x128xbf16>, vector<128x128xbf16>, vector<16x128xf32> -> vector<16x128xf32>
    %c0_3 = arith.constant 0 : index
    %c0_4 = arith.constant 0 : index
    %3 = vector.load %arg4[%c0_3, %c0_4] : memref<8x128xf32, #tpu.memory_space<vmem>>, vector<1x128xf32>
    %4 = vector.broadcast %3 : vector<1x128xf32> to vector<16x128xf32>
    %5 = arith.addf %2, %4 : vector<16x128xf32>
    %cst_5 = arith.constant 5.000000e-01 : f32
    %6 = vector.broadcast %cst_5 : f32 to vector<16x128xf32>
    %7 = arith.mulf %6, %5 : vector<16x128xf32>
    %cst_6 = arith.constant 0.707106769 : f32
    %8 = vector.broadcast %cst_6 : f32 to vector<16x128xf32>
    %9 = arith.mulf %5, %8 : vector<16x128xf32>
    %10 = math.erf %9 : vector<16x128xf32>
    %cst_7 = arith.constant 1.000000e+00 : f32
    %11 = vector.broadcast %cst_7 : f32 to vector<16x128xf32>
    %12 = arith.addf %11, %10 : vector<16x128xf32>
    %13 = arith.mulf %7, %12 : vector<16x128xf32>
    %c2 = arith.constant 2 : index
    %c0_8 = arith.constant 0 : index
    %14 = vector.load %arg4[%c2, %c0_8] : memref<8x128xf32, #tpu.memory_space<vmem>>, vector<1x128xf32>
    %c3 = arith.constant 3 : index
    %c0_9 = arith.constant 0 : index
    %15 = vector.load %arg4[%c3, %c0_9] : memref<8x128xf32, #tpu.memory_space<vmem>>, vector<1x128xf32>
    %cst_10 = arith.constant dense<0.000000e+00> : vector<16xf32>
    %16 = vector.multi_reduction <add>, %13, %cst_10 [1] : vector<16x128xf32> to vector<16xf32>
    %17 = vector.shape_cast %16 : vector<16xf32> to vector<16x1xf32>
    %cst_11 = arith.constant 3.125000e-02 : f32
    %18 = vector.broadcast %cst_11 : f32 to vector<16x1xf32>
    %19 = arith.mulf %17, %18 : vector<16x1xf32>
    %20 = vector.broadcast %19 : vector<16x1xf32> to vector<16x128xf32>
    %21 = arith.subf %13, %20 : vector<16x128xf32>
    %22 = tpu.iota {dimensions = array<i32: 1>} : vector<1x128xi32>
    %c32_i32 = arith.constant 32 : i32
    %23 = vector.broadcast %c32_i32 : i32 to vector<1x128xi32>
    %24 = arith.cmpi slt, %22, %23 : vector<1x128xi32>
    %cst_12 = arith.constant 0.000000e+00 : f32
    %25 = vector.shape_cast %24 : vector<1x128xi1> to vector<1x128xi1>
    %26 = vector.broadcast %25 : vector<1x128xi1> to vector<16x128xi1>
    %27 = vector.broadcast %cst_12 : f32 to vector<16x128xf32>
    %28 = arith.select %26, %21, %27 : vector<16x128xi1>, vector<16x128xf32>
    %29 = arith.mulf %28, %28 : vector<16x128xf32>
    %cst_13 = arith.constant dense<0.000000e+00> : vector<16xf32>
    %30 = vector.multi_reduction <add>, %29, %cst_13 [1] : vector<16x128xf32> to vector<16xf32>
    %31 = vector.shape_cast %30 : vector<16xf32> to vector<16x1xf32>
    %cst_14 = arith.constant 3.125000e-02 : f32
    %32 = vector.broadcast %cst_14 : f32 to vector<16x1xf32>
    %33 = arith.mulf %31, %32 : vector<16x1xf32>
    %cst_15 = arith.constant 9.99999997E-7 : f32
    %34 = vector.broadcast %cst_15 : f32 to vector<16x1xf32>
    %35 = arith.addf %33, %34 : vector<16x1xf32>
    %36 = math.rsqrt %35 : vector<16x1xf32>
    %37 = vector.broadcast %36 : vector<16x1xf32> to vector<16x128xf32>
    %38 = arith.mulf %28, %37 : vector<16x128xf32>
    %39 = vector.broadcast %14 : vector<1x128xf32> to vector<16x128xf32>
    %40 = arith.mulf %38, %39 : vector<16x128xf32>
    %41 = vector.broadcast %15 : vector<1x128xf32> to vector<16x128xf32>
    %42 = arith.addf %40, %41 : vector<16x128xf32>
    %43 = arith.truncf %42 : vector<16x128xf32> to vector<16x128xbf16>
    %c0_16 = arith.constant 0 : index
    %c0_17 = arith.constant 0 : index
    %44 = vector.load %arg3[%c0_16, %c0_17] : memref<128x128xbf16, #tpu.memory_space<vmem>>, vector<128x128xbf16>
    %cst_18 = arith.constant dense<0.000000e+00> : vector<16x128xf32>
    %45 = tpu.matmul %43, %44, %cst_18 {dimension_numbers = #tpu.dot_dimension_numbers<[1], [0], [0], [1], [0, 0, 1, 1], [], []>} : vector<16x128xbf16>, vector<128x128xbf16>, vector<16x128xf32> -> vector<16x128xf32>
    %c1 = arith.constant 1 : index
    %c0_19 = arith.constant 0 : index
    %46 = vector.load %arg4[%c1, %c0_19] : memref<8x128xf32, #tpu.memory_space<vmem>>, vector<1x128xf32>
    %47 = vector.broadcast %46 : vector<1x128xf32> to vector<16x128xf32>
    %48 = arith.addf %45, %47 : vector<16x128xf32>
    %c0_20 = arith.constant 0 : index
    %c0_21 = arith.constant 0 : index
    %49 = vector.load %arg5[%c0_20, %c0_21] : memref<16x128xf32, #tpu.memory_space<vmem>>, vector<16x128xf32>
    tpu.vector_store %arg5[%c0_20, %c0_21], %48 {strides = array<i32>} : memref<16x128xf32, #tpu.memory_space<vmem>>, vector<16x128xf32>,
    return
  }
  func.func @transform_0(%arg0: i32) -> (i32, i32) {
    %c0_i32 = arith.constant 0 : i32
    %c0_i32_0 = arith.constant 0 : i32
    return %arg0, %c0_i32 : i32, i32
  }
  func.func @transform_1(%arg0: i32) -> (i32, i32) {
    %c0_i32 = arith.constant 0 : i32
    %c0_i32_0 = arith.constant 0 : i32
    %c0_i32_1 = arith.constant 0 : i32
    return %c0_i32, %c0_i32_0 : i32, i32
  }
  func.func @transform_2(%arg0: i32) -> (i32, i32) {
    %c0_i32 = arith.constant 0 : i32
    %c0_i32_0 = arith.constant 0 : i32
    %c0_i32_1 = arith.constant 0 : i32
    return %c0_i32, %c0_i32_0 : i32, i32
  }
  func.func @transform_3(%arg0: i32) -> (i32, i32) {
    %c0_i32 = arith.constant 0 : i32
    %c0_i32_0 = arith.constant 0 : i32
    %c0_i32_1 = arith.constant 0 : i32
    return %c0_i32, %c0_i32_0 : i32, i32
  }
  func.func @transform_4(%arg0: i32) -> (i32, i32) {
    %c0_i32 = arith.constant 0 : i32
    %c0_i32_0 = arith.constant 0 : i32
    return %arg0, %c0_i32 : i32, i32
  }
}

</mosaic_0001>

<llo_original>
// kernel: tpu_custom_call.1
$region0: #{tpu_custom_call.1}
  #allocation0 [shape = 'u32[]', space=smem, size = 0x4, offset = 0x4, fixed_abs, tag = 'smem constant byte address 0x4 - core index']
  #allocation1 [shape = 'u32[144,128]{1,0:T(1,128)}', space=vmem, size = 0x12000, scoped, tag = 'internal scratch']
  %s0 = inlined_call_operand.hbm [shape: bf16[16,128], index: 0, kind: input, shape index: {}]
  %s1 = inlined_call_operand.hbm [shape: bf16[128,128], index: 1, kind: input, shape index: {}]
  %s2 = inlined_call_operand.hbm [shape: bf16[128,128], index: 2, kind: input, shape index: {}]
  %s3 = inlined_call_operand.vmem [shape: f32[8,128], index: 3, kind: input, shape index: {}]
  %s4 = inlined_call_operand.hbm [shape: f32[16,128], index: 4, kind: output, shape index: {}]
  %s5 = sld [smem:[#allocation0]]
  $region38: #{tpu_custom_call.1} parent=0
    _
  %s7 = ssub.s32 1, %s5
  %s8 = scalar_select 0, %s7, %s5
  $region1: #{tpu_custom_call.1} parent=0
    #allocation2 [shape = 'u8[4096]{0}', space=vmem, size = 0x1000, scoped, tag = 'input window, operand 0, single buffered']
    #allocation3 [shape = 's32[1]{0}', space=sflag, size = 0x4, scoped, tag = 'scoped memory for tpu_custom_call.1']
    #allocation4 [shape = 's32[1]{0}', space=sflag, size = 0x4, scoped, tag = 'scoped memory for tpu_custom_call.1']
    #allocation5 [shape = 'u8[32768]{0}', space=vmem, size = 0x8000, scoped, tag = 'input window, operand 1, single buffered']
    #allocation6 [shape = 's32[1]{0}', space=sflag, size = 0x4, scoped, tag = 'scoped memory for tpu_custom_call.1']
    #allocation7 [shape = 'u8[32768]{0}', space=vmem, size = 0x8000, scoped, tag = 'input window, operand 2, single buffered']
    #allocation8 [shape = 'u8[8192]{0}', space=vmem, size = 0x2000, scoped, tag = 'output window, operand 0, single buffered']
    %9 = vsyncpa [#allocation3], 0
    %10 = vsyncpa [#allocation6], 0
    %11 = vsyncpa [#allocation4], 0
    // Predicated region
    $region2: #{tpu_custom_call.1} parent=1 // pred_check
      _
    $region3: #{tpu_custom_call.1} parent=1 // pred_check_branch
      %13 = sbr.rel (0) target = $region5
    $region4: #{tpu_custom_call.1} parent=1 // pred_region
      %s15 = ssub.s32 128, 128
      %16 = vsyncadd [#allocation3], %s15
      %s17 = sshll.u32 [#allocation2], 4
      %s18 = int_to_ptr.vmem [resolvable:$true] %s17
      %23 = dma.hbm_to_vmem [thread:$0]  %s0, 128, %s18, [#allocation3], 64, 64, 4
    $region5: #{tpu_custom_call.1} parent=1 // pred_fallthru
      _
    // Predicated region
    $region6: #{tpu_custom_call.1} parent=1 // pred_check
      _
    $region7: #{tpu_custom_call.1} parent=1 // pred_check_branch
      %25 = sbr.rel (0) target = $region9
    $region8: #{tpu_custom_call.1} parent=1 // pred_region
      %s27 = ssub.s32 1024, 1024
      %28 = vsyncadd [#allocation6], %s27
      %s29 = sshll.u32 [#allocation5], 4
      %s30 = int_to_ptr.vmem [resolvable:$true] %s29
      %35 = dma.hbm_to_vmem [thread:$0]  %s1, 1024, %s30, [#allocation6], 64, 64, 4
    $region9: #{tpu_custom_call.1} parent=1 // pred_fallthru
      _
    // Predicated region
    $region10: #{tpu_custom_call.1} parent=1 // pred_check
      _
    $region11: #{tpu_custom_call.1} parent=1 // pred_check_branch
      %37 = sbr.rel (0) target = $region13
    $region12: #{tpu_custom_call.1} parent=1 // pred_region
      %s39 = ssub.s32 1024, 1024
      %40 = vsyncadd [#allocation6], %s39
      %s41 = sshll.u32 [#allocation7], 4
      %s42 = int_to_ptr.vmem [resolvable:$true] %s41
      %47 = dma.hbm_to_vmem [thread:$0]  %s2, 1024, %s42, [#allocation6], 64, 64, 4
    $region13: #{tpu_custom_call.1} parent=1 // pred_fallthru
      _
    // Predicated region
    $region14: #{tpu_custom_call.1} parent=1 // pred_check
      _
    $region15: #{tpu_custom_call.1} parent=1 // pred_check_branch
      %49 = sbr.rel (0) target = $region17
    $region16: #{tpu_custom_call.1} parent=1 // pred_region
      _
    $region17: #{tpu_custom_call.1} parent=1 // pred_fallthru
      _
    // Predicated region
    $region18: #{tpu_custom_call.1} parent=1 // pred_check
      _
    $region19: #{tpu_custom_call.1} parent=1 // pred_check_branch
      %51 = sbr.rel (0) target = $region21
    $region20: #{tpu_custom_call.1} parent=1 // pred_region
      %52 = dma.done [#allocation3], 128
    $region21: #{tpu_custom_call.1} parent=1 // pred_fallthru
      _
    // Predicated region
    $region22: #{tpu_custom_call.1} parent=1 // pred_check
      _
    $region23: #{tpu_custom_call.1} parent=1 // pred_check_branch
      %54 = sbr.rel (0) target = $region25
    $region24: #{tpu_custom_call.1} parent=1 // pred_region
      %55 = dma.done [#allocation6], 1024
    $region25: #{tpu_custom_call.1} parent=1 // pred_fallthru
      _
    // Predicated region
    $region26: #{tpu_custom_call.1} parent=1 // pred_check
      _
    $region27: #{tpu_custom_call.1} parent=1 // pred_check_branch
      %57 = sbr.rel (0) target = $region29
    $region28: #{tpu_custom_call.1} parent=1 // pred_region
      %58 = dma.done [#allocation6], 1024
    $region29: #{tpu_custom_call.1} parent=1 // pred_fallthru
      _
    %v60 = vld [vmem:[#allocation2] sm:$0xf]
    %v61 = vld [vmem:[#allocation2 + $0x4] sm:$0xf]
    %v62 = vld [vmem:[#allocation5] sm:$0xf]
    %v63 = vld [vmem:[#allocation5 + $0x4] sm:$0xf]
    %v64 = vld [vmem:[#allocation5 + $0x8] sm:$0xf]
    %v65 = vld [vmem:[#allocation5 + $0xc] sm:$0xf]
    %v66 = vld [vmem:[#allocation5 + $0x10] sm:$0xf]
    %v67 = vld [vmem:[#allocation5 + $0x14] sm:$0xf]
    %v68 = vld [vmem:[#allocation5 + $0x18] sm:$0xf]
    %v69 = vld [vmem:[#allocation5 + $0x1c] sm:$0xf]
    %v70 = vld [vmem:[#allocation5 + $0x20] sm:$0xf]
    %v71 = vld [vmem:[#allocation5 + $0x24] sm:$0xf]
    %v72 = vld [vmem:[#allocation5 + $0x28] sm:$0xf]
    %v73 = vld [vmem:[#allocation5 + $0x2c] sm:$0xf]
    %v74 = vld [vmem:[#allocation5 + $0x30] sm:$0xf]
    %v75 = vld [vmem:[#allocation5 + $0x34] sm:$0xf]
    %v76 = vld [vmem:[#allocation5 + $0x38] sm:$0xf]
    %v77 = vld [vmem:[#allocation5 + $0x3c] sm:$0xf]
    %v78 = vld [vmem:[%s3] sm:$0x1]
    %v79 = vlaneseq
    %v80 = vshrl.u32 %v79, 7
    %v81 = vsub.s32 0, %v80
    %v82 = vrot.slane %v78, %v81
    %v85 = vunpack.c.l.b16 %v60
    %v86 = vunpack.c.l.b16 %v61
    %v87 = vpack.c.b16 %v86, %v85
    %v105 = vunpack.c.l.b16 %v62
    %v106 = vunpack.c.l.b16 %v63
    %v107 = vunpack.c.l.b16 %v64
    %v108 = vunpack.c.l.b16 %v65
    %v109 = vunpack.c.l.b16 %v66
    %v110 = vunpack.c.l.b16 %v67
    %v111 = vunpack.c.l.b16 %v68
    %v112 = vunpack.c.l.b16 %v69
    %v113 = vunpack.c.l.b16 %v70
    %v114 = vunpack.c.l.b16 %v71
    %v115 = vunpack.c.l.b16 %v72
    %v116 = vunpack.c.l.b16 %v73
    %v117 = vunpack.c.l.b16 %v74
    %v118 = vunpack.c.l.b16 %v75
    %v119 = vunpack.c.l.b16 %v76
    %v120 = vunpack.c.l.b16 %v77
    %v121 = vpack.c.b16 %v106, %v105
    %v122 = vpack.c.b16 %v108, %v107
    %v123 = vpack.c.b16 %v110, %v109
    %v124 = vpack.c.b16 %v112, %v111
    %v125 = vpack.c.b16 %v114, %v113
    %v126 = vpack.c.b16 %v116, %v115
    %v127 = vpack.c.b16 %v118, %v117
    %v128 = vpack.c.b16 %v120, %v119
    %137 = vmatprep.subr.bf16.mxu0 0
    %138 = vmatpush1.bf16.msra.mxu0 %v121
    %139 = vmatprep.subr.bf16.mxu0 0
    %140 = vmatpush1.bf16.msra.mxu0 %v122
    %141 = vmatprep.subr.bf16.mxu0 0
    %142 = vmatpush1.bf16.msra.mxu0 %v123
    %143 = vmatprep.subr.bf16.mxu0 0
    %144 = vmatpush1.bf16.msra.mxu0 %v124
    %145 = vmatprep.subr.bf16.mxu0 0
    %146 = vmatpush1.bf16.msra.mxu0 %v125
    %147 = vmatprep.subr.bf16.mxu0 0
    %148 = vmatpush1.bf16.msra.mxu0 %v126
    %149 = vmatprep.subr.bf16.mxu0 0
    %150 = vmatpush1.bf16.msra.mxu0 %v127
    %151 = vmatprep.subr.bf16.mxu0 0
    %152 = vmatpush1.bf16.msra.mxu0 %v128
    %153 = vmatprep.subr.bf16.mxu0 0
    %154 = vmatpush1.bf16.msra.mxu0 0
    %155 = vmatprep.subr.bf16.mxu0 0
    %156 = vmatpush1.bf16.msra.mxu0 0
    %157 = vmatprep.subr.bf16.mxu0 0
    %158 = vmatpush1.bf16.msra.mxu0 0
    %159 = vmatprep.subr.bf16.mxu0 0
    %160 = vmatpush1.bf16.msra.mxu0 0
    %161 = vmatprep.subr.bf16.mxu0 0
    %162 = vmatpush1.bf16.msra.mxu0 0
    %163 = vmatprep.subr.bf16.mxu0 0
    %164 = vmatpush1.bf16.msra.mxu0 0
    %165 = vmatprep.subr.bf16.mxu0 0
    %166 = vmatpush1.bf16.msra.mxu0 0
    %167 = vmatprep.subr.bf16.mxu0 0
    %168 = vmatpush1.bf16.msra.mxu0 0
    %169 = vmatprep.mubr.bf16.mxu0 0
    %170 = vmatmul.mubr.bf16.gmra.mrb[0].mxu0 %v87
    %v171 = vpop.f32.mrb[0].mxu0
    %v172 = vadd.f32 %v82, %v171
    %v173 = vpop.f32.mrb[0].mxu0
    %v174 = vpop.f32.mrb[0].mxu0
    %v175 = vadd.f32 %v82, %v174
    %v176 = vpop.f32.mrb[0].mxu0
    %177 = vdwg.mxu0
    %v178 = vmul.f32 %v172, 0.5
    %v179 = vmul.f32 %v175, 0.5
    %v180 = vmul.f32 %v172, 0.70710677
    %v181 = vmul.f32 %v175, 0.70710677
    %v182 = verf.f32.pop %v180
    %v183 = verf.f32.pop %v181
    %v184 = vadd.f32 %v182, 1.0
    %v185 = vadd.f32 %v183, 1.0
    %v186 = vmul.f32 %v178, %v184
    %v187 = vmul.f32 %v179, %v185
    %v188 = vld [vmem:[%s3 + $0x2] sm:$0x1]
    %v189 = vld [vmem:[%s3 + $0x3] sm:$0x1]
    %190 = vadd.xlane.f32.xlu0 %v186
    %v191 = vpop.xlane.xlu0 %190
    %192 = vadd.xlane.f32.xlu0 %v187
    %v193 = vpop.xlane.xlu0 %192
    %v194 = vmul.f32 %v191, 0.03125
    %v195 = vmul.f32 %v193, 0.03125
    %v196 = vsub.f32 %v186, %v194
    %v197 = vsub.f32 %v187, %v195
    %v198 = vlaneseq
    %v199 = vand.u32 %v198, 127
    %vm200 = vcmp.lt.s32.totalorder %v199, 32
    %v201 = vsel %vm200, 1, 0
    %vm202 = vcmp.eq.s32.totalorder %v201, 1
    %v203 = vsel %vm202, %v196, 0.0
    %v204 = vsel %vm202, %v197, 0.0
    %v205 = vmul.f32 %v203, %v203
    %v206 = vmul.f32 %v204, %v204
    %207 = vadd.xlane.f32.xlu0 %v205
    %v208 = vpop.xlane.xlu0 %207
    %209 = vadd.xlane.f32.xlu0 %v206
    %v210 = vpop.xlane.xlu0 %209
    %v211 = vmul.f32 %v208, 0.03125
    %v212 = vmul.f32 %v210, 0.03125
    %v213 = vadd.f32 %v211, 1e-06
    %v214 = vadd.f32 %v212, 1e-06
    %v215 = vrsqrt.pop %v213
    %v216 = vrsqrt.pop %v214
    %v217 = vmul.f32 %v203, %v215
    %v218 = vmul.f32 %v204, %v216
    %v219 = vlaneseq
    %v220 = vshrl.u32 %v219, 7
    %v221 = vsub.s32 0, %v220
    %v222 = vrot.slane %v188, %v221
    %v223 = vmul.f32 %v217, %v222
    %v224 = vmul.f32 %v218, %v222
    %v225 = vlaneseq
    %v226 = vshrl.u32 %v225, 7
    %v227 = vsub.s32 0, %v226
    %v228 = vrot.slane %v189, %v227
    %v229 = vadd.f32 %v223, %v228
    %v230 = vadd.f32 %v224, %v228
    %v231 = vpack.c.bf16 %v230, %v229
    %v232 = vld [vmem:[#allocation7] sm:$0xf]
    %v233 = vld [vmem:[#allocation7 + $0x4] sm:$0xf]
    %v234 = vld [vmem:[#allocation7 + $0x8] sm:$0xf]
    %v235 = vld [vmem:[#allocation7 + $0xc] sm:$0xf]
    %v236 = vld [vmem:[#allocation7 + $0x10] sm:$0xf]
    %v237 = vld [vmem:[#allocation7 + $0x14] sm:$0xf]
    %v238 = vld [vmem:[#allocation7 + $0x18] sm:$0xf]
    %v239 = vld [vmem:[#allocation7 + $0x1c] sm:$0xf]
    %v240 = vld [vmem:[#allocation7 + $0x20] sm:$0xf]
    %v241 = vld [vmem:[#allocation7 + $0x24] sm:$0xf]
    %v242 = vld [vmem:[#allocation7 + $0x28] sm:$0xf]
    %v243 = vld [vmem:[#allocation7 + $0x2c] sm:$0xf]
    %v244 = vld [vmem:[#allocation7 + $0x30] sm:$0xf]
    %v245 = vld [vmem:[#allocation7 + $0x34] sm:$0xf]
    %v246 = vld [vmem:[#allocation7 + $0x38] sm:$0xf]
    %v247 = vld [vmem:[#allocation7 + $0x3c] sm:$0xf]
    %v248 = vld [vmem:[%s3 + $0x1] sm:$0x1]
    %v249 = vlaneseq
    %v250 = vshrl.u32 %v249, 7
    %v251 = vsub.s32 0, %v250
    %v252 = vrot.slane %v248, %v251
    %v269 = vunpack.c.l.b16 %v232
    %v270 = vunpack.c.l.b16 %v233
    %v271 = vunpack.c.l.b16 %v234
    %v272 = vunpack.c.l.b16 %v235
    %v273 = vunpack.c.l.b16 %v236
    %v274 = vunpack.c.l.b16 %v237
    %v275 = vunpack.c.l.b16 %v238
    %v276 = vunpack.c.l.b16 %v239
    %v277 = vunpack.c.l.b16 %v240
    %v278 = vunpack.c.l.b16 %v241
    %v279 = vunpack.c.l.b16 %v242
    %v280 = vunpack.c.l.b16 %v243
    %v281 = vunpack.c.l.b16 %v244
    %v282 = vunpack.c.l.b16 %v245
    %v283 = vunpack.c.l.b16 %v246
    %v284 = vunpack.c.l.b16 %v247
    %v285 = vpack.c.b16 %v270, %v269
    %v286 = vpack.c.b16 %v272, %v271
    %v287 = vpack.c.b16 %v274, %v273
    %v288 = vpack.c.b16 %v276, %v275
    %v289 = vpack.c.b16 %v278, %v277
    %v290 = vpack.c.b16 %v280, %v279
    %v291 = vpack.c.b16 %v282, %v281
    %v292 = vpack.c.b16 %v284, %v283
    %301 = vmatprep.subr.bf16.mxu0 0
    %302 = vmatpush1.bf16.msra.mxu0 %v285
    %303 = vmatprep.subr.bf16.mxu0 0
    %304 = vmatpush1.bf16.msra.mxu0 %v286
    %305 = vmatprep.subr.bf16.mxu0 0
    %306 = vmatpush1.bf16.msra.mxu0 %v287
    %307 = vmatprep.subr.bf16.mxu0 0
    %308 = vmatpush1.bf16.msra.mxu0 %v288
    %309 = vmatprep.subr.bf16.mxu0 0
    %310 = vmatpush1.bf16.msra.mxu0 %v289
    %311 = vmatprep.subr.bf16.mxu0 0
    %312 = vmatpush1.bf16.msra.mxu0 %v290
    %313 = vmatprep.subr.bf16.mxu0 0
    %314 = vmatpush1.bf16.msra.mxu0 %v291
    %315 = vmatprep.subr.bf16.mxu0 0
    %316 = vmatpush1.bf16.msra.mxu0 %v292
    %317 = vmatprep.subr.bf16.mxu0 0
    %318 = vmatpush1.bf16.msra.mxu0 0
    %319 = vmatprep.subr.bf16.mxu0 0
    %320 = vmatpush1.bf16.msra.mxu0 0
    %321 = vmatprep.subr.bf16.mxu0 0
    %322 = vmatpush1.bf16.msra.mxu0 0
    %323 = vmatprep.subr.bf16.mxu0 0
    %324 = vmatpush1.bf16.msra.mxu0 0
    %325 = vmatprep.subr.bf16.mxu0 0
    %326 = vmatpush1.bf16.msra.mxu0 0
    %327 = vmatprep.subr.bf16.mxu0 0
    %328 = vmatpush1.bf16.msra.mxu0 0
    %329 = vmatprep.subr.bf16.mxu0 0
    %330 = vmatpush1.bf16.msra.mxu0 0
    %331 = vmatprep.subr.bf16.mxu0 0
    %332 = vmatpush1.bf16.msra.mxu0 0
    %333 = vmatprep.mubr.bf16.mxu0 0
    %334 = vmatmul.mubr.bf16.gmra.mrb[0].mxu0 %v231
    %v335 = vpop.f32.mrb[0].mxu0
    %v336 = vadd.f32 %v252, %v335
    %v337 = vpop.f32.mrb[0].mxu0
    %v338 = vpop.f32.mrb[0].mxu0
    %v339 = vadd.f32 %v252, %v338
    %v340 = vpop.f32.mrb[0].mxu0
    %341 = vdwg.mxu0
    %342 = vst [vmem:[#allocation8] sm:$0xff] %v336
    %343 = vst [vmem:[#allocation8 + $0x8] sm:$0xff] %v339
    // Predicated region
    $region30: #{tpu_custom_call.1} parent=1 // pred_check
      _
    $region31: #{tpu_custom_call.1} parent=1 // pred_check_branch
      %345 = sbr.rel (0) target = $region33
    $region32: #{tpu_custom_call.1} parent=1 // pred_region
      %s347 = ssub.s32 256, 256
      %348 = vsyncadd [#allocation4], %s347
      %s349 = sshll.u32 [#allocation8], 4
      %s350 = int_to_ptr.vmem [resolvable:$true] %s349
      %355 = dma.vmem_to_hbm [thread:$0]  %s350, 256, %s4, [#allocation4], 128, 128, 8
    $region33: #{tpu_custom_call.1} parent=1 // pred_fallthru
      _
    // Predicated region
    $region34: #{tpu_custom_call.1} parent=1 // pred_check
      _
    $region35: #{tpu_custom_call.1} parent=1 // pred_check_branch
      %357 = sbr.rel (0) target = $region37
    $region36: #{tpu_custom_call.1} parent=1 // pred_region
      %358 = dma.done [#allocation4], 256
    $region37: #{tpu_custom_call.1} parent=1 // pred_fallthru
      _
    %359 = vsyncpa [#allocation3], 1
    %360 = vsyncpa [#allocation6], 1
    %361 = vsyncpa [#allocation4], 1

</llo_original>
